<compile_context>
chip_gen: v5e
topology: v5e:2x2
jax: 0.10.0
libtpu: 0.0.40
codegen_flags: <defaults>
</compile_context>

<pallas_src>
import jax
import jax.numpy as jnp
from jax.experimental import pallas as pl
from jax.experimental.pallas import tpu as pltpu


def make_mlp_readout_kernel(num_layers):
    """Fused kernel: (matmul + bias + relu) x (num_layers-1), then matmul + bias.

    NOTE: the ragged last grid block pushes zero-padded rows through the chain;
    this is safe only because every op here is strictly row-wise and Pallas
    drops out-of-bounds output rows.  Do not add cross-row reductions.
    """
    def kernel(*refs):
        x_ref, o_ref = refs[0], refs[-1]
        act_dtype = x_ref.dtype  # keep MXU inputs narrow (bf16 stays bf16)
        y = x_ref[...]
        for l in range(num_layers):
            w_ref = refs[1 + 2 * l]
            b_ref = refs[2 + 2 * l]
            y = jnp.dot(y.astype(act_dtype), w_ref[...],
                        preferred_element_type=jnp.float32)
            y = y + b_ref[...].astype(jnp.float32)
            if l < num_layers - 1:
                y = jnp.maximum(y, 0.0)
        o_ref[...] = y.astype(o_ref.dtype)
    return kernel


def _round_up(n, m):
    return -(-n // m) * m


def _sublane_rows(itemsize):
    # Packed rows per sublane tile: f32 -> 8, bf16 -> 16, int8/fp8 -> 32.
    return max(8, 32 // max(1, itemsize))


def _vmem_limit_bytes():
    """Explicit per-core VMEM limit: conservative on v7x (64 MiB/TC), generous
    on v5e/v6e (128 MiB physical; raises v5e's 16 MiB scoped default)."""
    try:
        kind = jax.devices()[0].device_kind.lower()
    except Exception:
        kind = ""
    if "v7" in kind:
        return 32 * 1024 * 1024
    if any(v in kind for v in ("v3", "v4", "v5", "v6")):
        return 64 * 1024 * 1024
    return 32 * 1024 * 1024  # unknown chip: stay safe


def _pick_block_n(N, x_itemsize, d_in, layer_dims, d_out_p, weight_bytes,
                  vmem_limit, sublane):
    """Sublane-/MXU-aligned batch tile budgeted against the explicit VMEM limit.

    layer_dims are the actual output widths of every layer (taken from the
    params), so the estimate does not assume the input_dim // 2**l structure.
    """
    # Per-row footprint: double-buffered x tile, double-buffered output tile,
    # plus f32 intermediates for every layer output.
    per_row = (2 * d_in + 2 * d_out_p) * x_itemsize + 4 * sum(layer_dims)
    # Leave room for the (conservatively double-counted) resident weights.
    budget = max(sublane * per_row, vmem_limit // 2 - 2 * weight_bytes)
    blk = min(2048, budget // per_row)
    # Megacore (v7x: 2 TCs): the 'parallel' axis only shards with >= 2 grid
    # steps; aim for >= 4 (2 per core) when N is large enough, which also
    # keeps the per-core x DMA pipelined against compute.
    if N >= 4 * 128:
        blk = min(blk, _round_up(-(-N // 4), sublane))
    blk = max(sublane, (blk // sublane) * sublane)
    if blk >= 256:
        blk = (blk // 128) * 128  # full MXU row passes for big tiles
    return max(sublane, min(blk, _round_up(N, sublane)))


def _full_spec(arr):
    """Whole-array block, same block every grid step (weights stay VMEM-resident)."""
    ndim = arr.ndim
    return pl.BlockSpec(arr.shape, lambda i, _n=ndim: (0,) * _n)


def mlp_readout(x, params, *, block_n=None, compute_dtype=None):
    """x: (N, input_dim). params: list of (W_{in,out}, b_{1,out}), one per layer.

    compute_dtype: optional narrower activation/weight dtype (e.g. bf16) for the
    HBM-bound x stream; accumulation remains f32. Numerics-changing, opt-in.
    """
    out_dtype = x.dtype
    if compute_dtype is not None and compute_dtype != x.dtype:
        x = x.astype(compute_dtype)
        params = [(w.astype(compute_dtype), b.astype(compute_dtype))
                  for (w, b) in params]

    num_layers = len(params)
    N, d_in = x.shape
    d_out = params[-1][0].shape[1]

    # Conditional lane padding: only worth inflating output HBM traffic when
    # d_out is already a sizable fraction of a 128-lane vreg; for tiny readout
    # dims the masked vst is far cheaper than (d_out_p/d_out)x extra bytes.
    pad_out = (d_out >= 64) and (d_out % 128 != 0)
    d_out_p = _round_up(d_out, 128) if pad_out else d_out
    wL, bL = params[-1]
    if pad_out:
        wL = jnp.zeros((wL.shape[0], d_out_p), wL.dtype).at[:, :d_out].set(wL)
        bL = jnp.zeros((1, d_out_p), bL.dtype).at[:, :d_out].set(bL)
    flat_params = []
    for l in range(num_layers - 1):
        flat_params += [params[l][0], params[l][1]]
    flat_params += [wL, bL]

    itemsize = x.dtype.itemsize
    sublane = _sublane_rows(itemsize)
    vmem_limit = _vmem_limit_bytes()
    layer_dims = [w.shape[1] for w in flat_params[0::2]]  # actual layer widths
    weight_bytes = sum(int(a.size) * a.dtype.itemsize for a in flat_params)

    if block_n is None:
        block_n = _pick_block_n(N, itemsize, d_in, layer_dims, d_out_p,
                                weight_bytes, vmem_limit, sublane)
    grid = (pl.cdiv(N, block_n),)

    flops = 2 * N * sum(w.shape[0] * w.shape[1] for w in flat_params[0::2])
    bytes_accessed = (N * d_in * itemsize + N * d_out_p * itemsize
                      + weight_bytes)

    in_specs = [pl.BlockSpec((block_n, d_in), lambda i: (i, 0))]  # x tile
    in_specs += [_full_spec(a) for a in flat_params]              # resident W/b

    out = pl.pallas_call(
        make_mlp_readout_kernel(num_layers),
        out_shape=jax.ShapeDtypeStruct((N, d_out_p), out_dtype),
        grid_spec=pl.GridSpec(
            grid=grid,
            in_specs=in_specs,
            out_specs=pl.BlockSpec((block_n, d_out_p), lambda i: (i, 0)),
        ),
        compiler_params=pltpu.CompilerParams(
            dimension_semantics=("parallel",),
            vmem_limit_bytes=vmem_limit),
        cost_estimate=pl.CostEstimate(
            flops=flops, transcendentals=0, bytes_accessed=bytes_accessed),
    )(x, *flat_params)

    if pad_out:
        # TODO(synk): this slice is a separate XLA copy pass; consumers that can
        # handle the padded width should take `out` directly to avoid it.
        return out[:, :d_out]
    return out


def init_mlp_readout_params(key, input_dim, output_dim, L=2, dtype=jnp.float32):
    """Deterministic synthetic init matching MLPReadout.__init__ shapes."""
    dims = [input_dim // (2 ** l) for l in range(L + 1)] + [output_dim]
    params = []
    for l in range(L + 1):
        d_in, d_out = dims[l], dims[l + 1]
        key, kw, kb = jax.random.split(key, 3)
        bound = 1.0 / jnp.sqrt(d_in)  # torch.nn.Linear default scale
        w = jax.random.uniform(kw, (d_in, d_out), dtype, -bound, bound)
        b = jax.random.uniform(kb, (1, d_out), dtype, -bound, bound)
        params.append((w, b))
    return params


def mlp_readout_ref(x, params):
    y = x
    for l in range(len(params) - 1):
        w, b = params[l]
        y = jnp.maximum(y @ w + b, 0.0)
    w, b = params[-1]
    return y @ w + b


if __name__ == "__main__":
    key = jax.random.PRNGKey(0)
    N, input_dim, output_dim, L = 8, 32, 4, 2

    key, kx = jax.random.split(key)
    x = jax.random.normal(kx, (N, input_dim), jnp.float32)
    params = init_mlp_readout_params(key, input_dim, output_dim, L=L)

    y = mlp_readout(x, params)
    y = jax.block_until_ready(y)

    y_ref = mlp_readout_ref(x, params)
    assert y.shape == (N, output_dim)
    assert jnp.allclose(y, y_ref, atol=1e-5, rtol=1e-5), "mismatch vs reference"

    print("KERNEL_OK")
</pallas_src>

<mosaic_0001>
module attributes {stable_mosaic.version = 11 : i64} {
  func.func @kernel(%arg0: i32, %arg1: memref<8x32xf32, #tpu.memory_space<vmem>>, %arg2: memref<32x16xf32, #tpu.memory_space<vmem>>, %arg3: memref<1x16xf32, #tpu.memory_space<vmem>>, %arg4: memref<16x8xf32, #tpu.memory_space<vmem>>, %arg5: memref<1x8xf32, #tpu.memory_space<vmem>>, %arg6: memref<8x4xf32, #tpu.memory_space<vmem>>, %arg7: memref<1x4xf32, #tpu.memory_space<vmem>>, %arg8: memref<8x4xf32, #tpu.memory_space<vmem>>) attributes {dimension_semantics = [#tpu.dimension_semantics<parallel>], iteration_bounds = array<i64: 1>, scalar_prefetch = 0 : i64, scratch_operands = 0 : i64, tpu.core_type = #tpu.core_type<tc>, window_params = [{transform_indices = @transform_0, window_bounds = array<i64: 8, 32>}, {pipeline_mode = #tpu.pipeline_mode<synchronous>, transform_indices = @transform_1, window_bounds = array<i64: 32, 16>}, {pipeline_mode = #tpu.pipeline_mode<synchronous>, transform_indices = @transform_2, window_bounds = array<i64: 1, 16>}, {pipeline_mode = #tpu.pipeline_mode<synchronous>, transform_indices = @transform_3, window_bounds = array<i64: 16, 8>}, {pipeline_mode = #tpu.pipeline_mode<synchronous>, transform_indices = @transform_4, window_bounds = array<i64: 1, 8>}, {pipeline_mode = #tpu.pipeline_mode<synchronous>, transform_indices = @transform_5, window_bounds = array<i64: 8, 4>}, {pipeline_mode = #tpu.pipeline_mode<synchronous>, transform_indices = @transform_6, window_bounds = array<i64: 1, 4>}, {transform_indices = @transform_7, window_bounds = array<i64: 8, 4>}]} {
    %c0 = arith.constant 0 : index
    %c0_0 = arith.constant 0 : index
    %0 = vector.load %arg1[%c0, %c0_0] : memref<8x32xf32, #tpu.memory_space<vmem>>, vector<8x32xf32>
    %c0_1 = arith.constant 0 : index
    %c0_2 = arith.constant 0 : index
    %1 = vector.load %arg2[%c0_1, %c0_2] : memref<32x16xf32, #tpu.memory_space<vmem>>, vector<32x16xf32>
    %cst = arith.constant dense<0.000000e+00> : vector<8x16xf32>
    %2 = tpu.matmul %0, %1, %cst {dimension_numbers = #tpu.dot_dimension_numbers<[1], [0], [0], [1], [0, 0, 1, 1], [], []>} : vector<8x32xf32>, vector<32x16xf32>, vector<8x16xf32> -> vector<8x16xf32>
    %c0_3 = arith.constant 0 : index
    %c0_4 = arith.constant 0 : index
    %3 = vector.load %arg3[%c0_3, %c0_4] : memref<1x16xf32, #tpu.memory_space<vmem>>, vector<1x16xf32>
    %4 = vector.broadcast %3 : vector<1x16xf32> to vector<8x16xf32>
    %5 = arith.addf %2, %4 : vector<8x16xf32>
    %cst_5 = arith.constant 0.000000e+00 : f32
    %6 = vector.broadcast %cst_5 : f32 to vector<8x16xf32>
    %7 = arith.maximumf %5, %6 : vector<8x16xf32>
    %c0_6 = arith.constant 0 : index
    %c0_7 = arith.constant 0 : index
    %8 = vector.load %arg4[%c0_6, %c0_7] : memref<16x8xf32, #tpu.memory_space<vmem>>, vector<16x8xf32>
    %cst_8 = arith.constant dense<0.000000e+00> : vector<8x8xf32>
    %9 = tpu.matmul %7, %8, %cst_8 {dimension_numbers = #tpu.dot_dimension_numbers<[1], [0], [0], [1], [0, 0, 1, 1], [], []>} : vector<8x16xf32>, vector<16x8xf32>, vector<8x8xf32> -> vector<8x8xf32>
    %c0_9 = arith.constant 0 : index
    %c0_10 = arith.constant 0 : index
    %10 = vector.load %arg5[%c0_9, %c0_10] : memref<1x8xf32, #tpu.memory_space<vmem>>, vector<1x8xf32>
    %11 = vector.broadcast %10 : vector<1x8xf32> to vector<8x8xf32>
    %12 = arith.addf %9, %11 : vector<8x8xf32>
    %cst_11 = arith.constant 0.000000e+00 : f32
    %13 = vector.broadcast %cst_11 : f32 to vector<8x8xf32>
    %14 = arith.maximumf %12, %13 : vector<8x8xf32>
    %c0_12 = arith.constant 0 : index
    %c0_13 = arith.constant 0 : index
    %15 = vector.load %arg6[%c0_12, %c0_13] : memref<8x4xf32, #tpu.memory_space<vmem>>, vector<8x4xf32>
    %cst_14 = arith.constant dense<0.000000e+00> : vector<8x4xf32>
    %16 = tpu.matmul %14, %15, %cst_14 {dimension_numbers = #tpu.dot_dimension_numbers<[1], [0], [0], [1], [0, 0, 1, 1], [], []>} : vector<8x8xf32>, vector<8x4xf32>, vector<8x4xf32> -> vector<8x4xf32>
    %c0_15 = arith.constant 0 : index
    %c0_16 = arith.constant 0 : index
    %17 = vector.load %arg7[%c0_15, %c0_16] : memref<1x4xf32, #tpu.memory_space<vmem>>, vector<1x4xf32>
    %18 = vector.broadcast %17 : vector<1x4xf32> to vector<8x4xf32>
    %19 = arith.addf %16, %18 : vector<8x4xf32>
    %c0_17 = arith.constant 0 : index
    %c0_18 = arith.constant 0 : index
    %20 = vector.load %arg8[%c0_17, %c0_18] : memref<8x4xf32, #tpu.memory_space<vmem>>, vector<8x4xf32>
    tpu.vector_store %arg8[%c0_17, %c0_18], %19 {strides = array<i32>} : memref<8x4xf32, #tpu.memory_space<vmem>>, vector<8x4xf32>,
    return
  }
  func.func @transform_0(%arg0: i32) -> (i32, i32) {
    %c0_i32 = arith.constant 0 : i32
    %c0_i32_0 = arith.constant 0 : i32
    return %arg0, %c0_i32 : i32, i32
  }
  func.func @transform_1(%arg0: i32) -> (i32, i32) {
    %c0_i32 = arith.constant 0 : i32
    %c0_i32_0 = arith.constant 0 : i32
    %c0_i32_1 = arith.constant 0 : i32
    return %c0_i32, %c0_i32_0 : i32, i32
  }
  func.func @transform_2(%arg0: i32) -> (i32, i32) {
    %c0_i32 = arith.constant 0 : i32
    %c0_i32_0 = arith.constant 0 : i32
    %c0_i32_1 = arith.constant 0 : i32
    return %c0_i32, %c0_i32_0 : i32, i32
  }
  func.func @transform_3(%arg0: i32) -> (i32, i32) {
    %c0_i32 = arith.constant 0 : i32
    %c0_i32_0 = arith.constant 0 : i32
    %c0_i32_1 = arith.constant 0 : i32
    return %c0_i32, %c0_i32_0 : i32, i32
  }
  func.func @transform_4(%arg0: i32) -> (i32, i32) {
    %c0_i32 = arith.constant 0 : i32
    %c0_i32_0 = arith.constant 0 : i32
    %c0_i32_1 = arith.constant 0 : i32
    return %c0_i32, %c0_i32_0 : i32, i32
  }
  func.func @transform_5(%arg0: i32) -> (i32, i32) {
    %c0_i32 = arith.constant 0 : i32
    %c0_i32_0 = arith.constant 0 : i32
    %c0_i32_1 = arith.constant 0 : i32
    return %c0_i32, %c0_i32_0 : i32, i32
  }
  func.func @transform_6(%arg0: i32) -> (i32, i32) {
    %c0_i32 = arith.constant 0 : i32
    %c0_i32_0 = arith.constant 0 : i32
    %c0_i32_1 = arith.constant 0 : i32
    return %c0_i32, %c0_i32_0 : i32, i32
  }
  func.func @transform_7(%arg0: i32) -> (i32, i32) {
    %c0_i32 = arith.constant 0 : i32
    %c0_i32_0 = arith.constant 0 : i32
    return %arg0, %c0_i32 : i32, i32
  }
}

</mosaic_0001>

<llo_original>
// kernel: tpu_custom_call.1
$region0: #{tpu_custom_call.1}
  #allocation0 [shape = 'u32[]', space=smem, size = 0x4, offset = 0x4, fixed_abs, tag = 'smem constant byte address 0x4 - core index']
  #allocation1 [shape = 'u32[72,128]{1,0:T(1,128)}', space=vmem, size = 0x9000, scoped, tag = 'internal scratch']
  %s0 = inlined_call_operand.vmem [shape: f32[8,32], index: 0, kind: input, shape index: {}]
  %s1 = inlined_call_operand.vmem [shape: f32[32,16], index: 1, kind: input, shape index: {}]
  %s2 = inlined_call_operand.vmem [shape: f32[1,16], index: 2, kind: input, shape index: {}]
  %s3 = inlined_call_operand.vmem [shape: f32[16,8], index: 3, kind: input, shape index: {}]
  %s4 = inlined_call_operand.vmem [shape: f32[1,8], index: 4, kind: input, shape index: {}]
  %s5 = inlined_call_operand.vmem [shape: f32[8,4], index: 5, kind: input, shape index: {}]
  %s6 = inlined_call_operand.vmem [shape: f32[1,4], index: 6, kind: input, shape index: {}]
  %s7 = inlined_call_operand.vmem [shape: f32[8,4], index: 7, kind: output, shape index: {}]
  %s8 = sld [smem:[#allocation0]]
  $region38: #{tpu_custom_call.1} parent=0
    _
  %s10 = ssub.s32 1, %s8
  %s11 = scalar_select 0, %s10, %s8
  // Predicated region
  $region2: #{tpu_custom_call.1} parent=0 // pred_check
    _
  $region3: #{tpu_custom_call.1} parent=0 // pred_check_branch
    %13 = sbr.rel (0) target = $region5
  $region4: #{tpu_custom_call.1} parent=0 // pred_region
    _
  $region5: #{tpu_custom_call.1} parent=0 // pred_fallthru
    _
  // Predicated region
  $region6: #{tpu_custom_call.1} parent=0 // pred_check
    _
  $region7: #{tpu_custom_call.1} parent=0 // pred_check_branch
    %15 = sbr.rel (0) target = $region9
  $region8: #{tpu_custom_call.1} parent=0 // pred_region
    _
  $region9: #{tpu_custom_call.1} parent=0 // pred_fallthru
    _
  // Predicated region
  $region10: #{tpu_custom_call.1} parent=0 // pred_check
    _
  $region11: #{tpu_custom_call.1} parent=0 // pred_check_branch
    %17 = sbr.rel (0) target = $region13
  $region12: #{tpu_custom_call.1} parent=0 // pred_region
    _
  $region13: #{tpu_custom_call.1} parent=0 // pred_fallthru
    _
  // Predicated region
  $region14: #{tpu_custom_call.1} parent=0 // pred_check
    _
  $region15: #{tpu_custom_call.1} parent=0 // pred_check_branch
    %19 = sbr.rel (0) target = $region17
  $region16: #{tpu_custom_call.1} parent=0 // pred_region
    _
  $region17: #{tpu_custom_call.1} parent=0 // pred_fallthru
    _
  // Predicated region
  $region18: #{tpu_custom_call.1} parent=0 // pred_check
    _
  $region19: #{tpu_custom_call.1} parent=0 // pred_check_branch
    %21 = sbr.rel (0) target = $region21
  $region20: #{tpu_custom_call.1} parent=0 // pred_region
    _
  $region21: #{tpu_custom_call.1} parent=0 // pred_fallthru
    _
  // Predicated region
  $region22: #{tpu_custom_call.1} parent=0 // pred_check
    _
  $region23: #{tpu_custom_call.1} parent=0 // pred_check_branch
    %23 = sbr.rel (0) target = $region25
  $region24: #{tpu_custom_call.1} parent=0 // pred_region
    _
  $region25: #{tpu_custom_call.1} parent=0 // pred_fallthru
    _
  // Predicated region
  $region26: #{tpu_custom_call.1} parent=0 // pred_check
    _
  $region27: #{tpu_custom_call.1} parent=0 // pred_check_branch
    %25 = sbr.rel (0) target = $region29
  $region28: #{tpu_custom_call.1} parent=0 // pred_region
    _
  $region29: #{tpu_custom_call.1} parent=0 // pred_fallthru
    _
  %v26 = vld [vmem:[%s0] sm:$0xff]
  %v27 = vld [vmem:[%s1] sm:$0xff]
  %v28 = vld [vmem:[%s1 + $0x8] sm:$0xff]
  %v29 = vld [vmem:[%s1 + $0x10] sm:$0xff]
  %v30 = vld [vmem:[%s1 + $0x18] sm:$0xff]
  %v31 = vld [vmem:[%s2] sm:$0x1]
  %v33 = vperm.slane %v31, 0
  %vm35 = vcmask 261120
  %v37 = vsel %vm35, %v26, 0
  %39 = vmatpush.msra.mxu0 0.0
  %40 = vmatpush.msra.mxu0 0.0
  %41 = vmatpush.msra.mxu0 0.0
  %42 = vmatpush.msra.mxu0 0.0
  %43 = vmatpush.msra.mxu0 0.0
  %44 = vmatpush.msra.mxu0 0.0
  %45 = vmatpush.msra.mxu0 0.0
  %46 = vmatpush.msra.mxu0 0.0
  %47 = vmatpush.msra.mxu0 0.0
  %48 = vmatpush.msra.mxu0 0.0
  %49 = vmatpush.msra.mxu0 0.0
  %50 = vmatpush.msra.mxu0 0.0
  %51 = vmatpush.msra.mxu0 %v30
  %52 = vmatpush.msra.mxu0 %v29
  %53 = vmatpush.msra.mxu0 %v28
  %54 = vmatpush.msra.mxu0 %v27
  %55 = vmatmul.f32.gmra.mxu0 %v37
  %v56 = vpop.f32.mrf.mxu0
  %v57 = vadd.f32 %v33, %v56
  %58 = vdwg.mxu0
  %v59 = vmax.f32 %v57, 0.0
  %v60 = vld [vmem:[%s3] sm:$0xff]
  %v61 = vld [vmem:[%s3 + $0x8] sm:$0xff]
  %v62 = vld [vmem:[%s4] sm:$0x1]
  %v64 = vperm.slane %v62, 0
  %vm66 = vcmask 130048
  %v68 = vsel %vm66, %v59, 0
  %70 = vmatpush.msra.mxu0 0.0
  %71 = vmatpush.msra.mxu0 0.0
  %72 = vmatpush.msra.mxu0 0.0
  %73 = vmatpush.msra.mxu0 0.0
  %74 = vmatpush.msra.mxu0 0.0
  %75 = vmatpush.msra.mxu0 0.0
  %76 = vmatpush.msra.mxu0 0.0
  %77 = vmatpush.msra.mxu0 0.0
  %78 = vmatpush.msra.mxu0 0.0
  %79 = vmatpush.msra.mxu0 0.0
  %80 = vmatpush.msra.mxu0 0.0
  %81 = vmatpush.msra.mxu0 0.0
  %82 = vmatpush.msra.mxu0 0.0
  %83 = vmatpush.msra.mxu0 0.0
  %84 = vmatpush.msra.mxu0 %v61
  %85 = vmatpush.msra.mxu0 %v60
  %86 = vmatmul.f32.gmra.mxu0 %v68
  %v87 = vpop.f32.mrf.mxu0
  %v88 = vadd.f32 %v64, %v87
  %89 = vdwg.mxu0
  %v90 = vmax.f32 %v88, 0.0
  %v91 = vld [vmem:[%s5] sm:$0xff]
  %v92 = vld [vmem:[%s6] sm:$0x1]
  %v94 = vperm.slane %v92, 0
  %vm96 = vcmask 64512
  %v98 = vsel %vm96, %v90, 0
  %100 = vmatpush.msra.mxu0 0.0
  %101 = vmatpush.msra.mxu0 0.0
  %102 = vmatpush.msra.mxu0 0.0
  %103 = vmatpush.msra.mxu0 0.0
  %104 = vmatpush.msra.mxu0 0.0
  %105 = vmatpush.msra.mxu0 0.0
  %106 = vmatpush.msra.mxu0 0.0
  %107 = vmatpush.msra.mxu0 0.0
  %108 = vmatpush.msra.mxu0 0.0
  %109 = vmatpush.msra.mxu0 0.0
  %110 = vmatpush.msra.mxu0 0.0
  %111 = vmatpush.msra.mxu0 0.0
  %112 = vmatpush.msra.mxu0 0.0
  %113 = vmatpush.msra.mxu0 0.0
  %114 = vmatpush.msra.mxu0 0.0
  %115 = vmatpush.msra.mxu0 %v91
  %116 = vmatmul.f32.gmra.mxu0 %v98
  %v117 = vpop.f32.mrf.mxu0
  %v118 = vadd.f32 %v94, %v117
  %119 = vdwg.mxu0
  %vm120 = vcmask 31744
  %121 = vst.msk [vmem:[%s7] sm:$0xff] %vm120, %v118
  // Predicated region
  $region30: #{tpu_custom_call.1} parent=0 // pred_check
    _
  $region31: #{tpu_custom_call.1} parent=0 // pred_check_branch
    %123 = sbr.rel (0) target = $region33
  $region32: #{tpu_custom_call.1} parent=0 // pred_region
    _
  $region33: #{tpu_custom_call.1} parent=0 // pred_fallthru
    _
  // Predicated region
  $region34: #{tpu_custom_call.1} parent=0 // pred_check
    _
  $region35: #{tpu_custom_call.1} parent=0 // pred_check_branch
    %125 = sbr.rel (0) target = $region37
  $region36: #{tpu_custom_call.1} parent=0 // pred_region
    _
  $region37: #{tpu_custom_call.1} parent=0 // pred_fallthru
    _

</llo_original>
